<compile_context>
chip_gen: v6e
topology: v6e:2x2x1
jax: 0.10.0
libtpu: 0.0.40
codegen_flags: <defaults>
</compile_context>

<pallas_src>
import jax
import jax.numpy as jnp
from jax.experimental import pallas as pl
from jax.experimental.pallas import tpu as pltpu

_LANES = 128
_SUBLANES = 8
_UNIT = _SUBLANES * _LANES          # 1024 elements = one f32 vreg
_MAX_TILE_ROWS = 2048               # 2048 x 128 x 4B = 1 MiB per f32 block
_FUSED_MAX_ELEMS = 64 * 1024        # single-block (no-grid) fast-path threshold


def _num_reduction_cores(max_rows):
    """2 on multi-TensorCore chips (v7x; also v4/v5p megacore) when there is
    enough work to split; 1 on single-TC v5e/v6e (keeps a size-1 axis)."""
    if max_rows < 4 * _MAX_TILE_ROWS:
        return 1
    try:
        dev = jax.devices()[0]
        if dev.platform != "tpu":
            return 1
        kind = (getattr(dev, "device_kind", "") or "").lower()
    except Exception:
        return 1
    return 2 if any(tag in kind for tag in ("v7", "v4", "v5p")) else 1


# ---------------------------------------------------------------------------
# Fused streaming reduction: any number of (a2d, b2d, mode) streams reduced in
# a single gridded pallas_call. Each stream is a lane-dense (rows, 128) view
# with rows a multiple of 8. Per-core partial sums land in one lane-dense
# (8, 128) output row per core; the tiny final reduce happens in the wrapper.
# ---------------------------------------------------------------------------
def _make_streaming_kernel(cfg, grid_steps, num_cores):
    n_streams = len(cfg)

    def kernel(*refs):
        in_refs = refs[:2 * n_streams]
        out_refs = refs[2 * n_streams:]
        c = pl.program_id(0)
        i = pl.program_id(1)

        @pl.when(i == 0)
        def _init():
            for o_ref in out_refs:
                o_ref[...] = jnp.zeros_like(o_ref)

        for s, (mode, rows, tile, steps, spc) in enumerate(cfg):
            a_ref = in_refs[2 * s]
            b_ref = in_refs[2 * s + 1]
            o_ref = out_refs[s]
            blk = c * spc + i

            def _accum(a_ref=a_ref, b_ref=b_ref, o_ref=o_ref, mode=mode,
                       rows=rows, tile=tile, blk=blk):
                d = a_ref[...].astype(jnp.float32) - b_ref[...].astype(jnp.float32)
                if rows % tile != 0:
                    # Only the stream's last block has garbage rows; mask by
                    # global row index (compiled out when rows % tile == 0).
                    row0 = blk * tile
                    rid = jax.lax.broadcasted_iota(jnp.int32, (tile, _LANES), 0)
                    d = jnp.where(row0 + rid < rows, d, 0.0)
                d = d * d if mode == "sq" else jnp.abs(d)
                # (tile//8, 8, 128) leading-axis sum: pure per-vreg VPU adds;
                # no cross-lane/sublane XLU work inside the streaming loop.
                o_ref[...] += jnp.sum(
                    d.reshape(tile // _SUBLANES, _SUBLANES, _LANES), axis=0)

            if steps == num_cores * spc and spc == grid_steps:
                _accum()  # every (core, step) hits a valid block of this stream
            else:
                # Gate shorter / ragged streams. Both conditions are required:
                # i < spc keeps per-core chunks disjoint; blk < steps bounds
                # the last core's chunk.
                pl.when(jnp.logical_and(i < spc, blk < steps))(_accum)

    return kernel


def _pallas_streaming_sums(entries):
    """entries: [(a2d, b2d, mode)], a2d/b2d of shape (rows, 128), rows % 8 == 0.
    Returns one scalar f32 sum per entry, all produced by ONE pallas_call."""
    num_cores = _num_reduction_cores(max(a.shape[0] for a, _, _ in entries))

    cfg = []
    for a2, _, mode in entries:
        rows = a2.shape[0]
        tile = min(_MAX_TILE_ROWS, rows)        # rows, tile both multiples of 8
        steps = pl.cdiv(rows, tile)
        spc = pl.cdiv(steps, num_cores)         # steps per core
        cfg.append((mode, rows, tile, steps, spc))
    grid_steps = max(c[4] for c in cfg)
    grid = (num_cores, grid_steps)

    operands, in_specs = [], []
    for (a2, b2, _), (_, rows, tile, steps, spc) in zip(entries, cfg):
        def index_map(c, i, steps=steps, spc=spc):
            # Clamp so gated-off steps re-use the last valid block (no OOB DMA,
            # no redundant re-fetch since the block index does not change).
            return (jnp.minimum(c * spc + i, steps - 1), 0)
        spec = pl.BlockSpec((tile, _LANES), index_map)
        operands += [a2, b2]
        in_specs += [spec, spec]

    out_specs = tuple(
        pl.BlockSpec((_SUBLANES, _LANES), lambda c, i: (c, 0)) for _ in entries)
    out_shapes = tuple(
        jax.ShapeDtypeStruct((num_cores * _SUBLANES, _LANES), jnp.float32)
        for _ in entries)

    total_elems = sum(rows * _LANES for (_, rows, _, _, _) in cfg)
    in_bytes = sum(int(a2.size) * a2.dtype.itemsize +
                   int(b2.size) * b2.dtype.itemsize for a2, b2, _ in entries)
    out_bytes = len(entries) * num_cores * _SUBLANES * _LANES * 4

    outs = pl.pallas_call(
        _make_streaming_kernel(cfg, grid_steps, num_cores),
        out_shape=out_shapes,
        grid_spec=pltpu.PrefetchScalarGridSpec(
            num_scalar_prefetch=0,
            grid=grid,
            in_specs=in_specs,
            out_specs=out_specs,
        ),
        compiler_params=pltpu.CompilerParams(
            dimension_semantics=("parallel", "arbitrary"),
            # Let XLA fuse the flatten/slice/reshape producers into the custom
            # call's operands so the lane-dense prefix never materializes as an
            # extra HBM copy feeding the kernel.
            allow_input_fusion=[True] * len(operands),
        ),
        cost_estimate=pl.CostEstimate(
            flops=int(3 * total_elems),
            transcendentals=0,
            bytes_accessed=int(in_bytes + out_bytes),
        ),
    )(*operands)
    if not isinstance(outs, (list, tuple)):
        outs = (outs,)
    # Tiny cross-lane/sublane reduce (a few KiB) done once, outside the kernel.
    return [jnp.sum(o) for o in outs]


def _streaming_sums(streams):
    """streams: [(a, b, mode)] -> list of scalar f32 sums of f(a - b).
    Bulk (largest multiple-of-1024 prefix) goes through one fused pallas_call;
    the <1024-element tail is reduced in plain jnp (no padded HBM copy)."""
    totals = [jnp.float32(0.0) for _ in streams]
    kernel_entries, kernel_slots = [], []
    for idx, (a, b, mode) in enumerate(streams):
        fa, fb = jnp.ravel(a), jnp.ravel(b)   # keep source dtype in HBM
        n = fa.shape[0]
        main = (n // _UNIT) * _UNIT
        if main < n:
            d = fa[main:].astype(jnp.float32) - fb[main:].astype(jnp.float32)
            totals[idx] = totals[idx] + (jnp.sum(d * d) if mode == "sq"
                                         else jnp.sum(jnp.abs(d)))
        if main > 0:
            kernel_entries.append((fa[:main].reshape(-1, _LANES),
                                   fb[:main].reshape(-1, _LANES), mode))
            kernel_slots.append(idx)
    if kernel_entries:
        sums = _pallas_streaming_sums(kernel_entries)
        for idx, s in zip(kernel_slots, sums):
            totals[idx] = totals[idx] + s
    return totals


# ---------------------------------------------------------------------------
# Tiny-input fast path: all streams reduced in ONE single-block pallas_call.
# ---------------------------------------------------------------------------
def _make_small_kernel(modes):
    n = len(modes)

    def kernel(*refs):
        in_refs = refs[:2 * n]
        out_refs = refs[2 * n:]
        for s, mode in enumerate(modes):
            d = (in_refs[2 * s][...].astype(jnp.float32)
                 - in_refs[2 * s + 1][...].astype(jnp.float32))
            d = d * d if mode == "sq" else jnp.abs(d)
            out_refs[s][...] = jnp.sum(d, keepdims=True)

    return kernel


def _pallas_small_sums(entries):
    """entries: [(a, b, mode)], each lane-aligned and small. One launch."""
    operands, modes = [], []
    for a, b, mode in entries:
        operands += [jnp.ravel(a).reshape(-1, _LANES),
                     jnp.ravel(b).reshape(-1, _LANES)]
        modes.append(mode)
    vmem = pltpu.MemorySpace.VMEM
    outs = pl.pallas_call(
        _make_small_kernel(modes),
        out_shape=tuple(jax.ShapeDtypeStruct((1, 1), jnp.float32) for _ in modes),
        in_specs=[pl.BlockSpec(memory_space=vmem) for _ in operands],
        out_specs=tuple(pl.BlockSpec(memory_space=vmem) for _ in modes),
        compiler_params=pltpu.CompilerParams(
            allow_input_fusion=[True] * len(operands)),
    )(*operands)
    if not isinstance(outs, (list, tuple)):
        outs = (outs,)
    return [o[0, 0] for o in outs]


def _single_block_ok(x):
    n = x.size
    return (n % _LANES == 0) and (0 < n <= _FUSED_MAX_ELEMS)


@jax.jit
def _latent_loss_l2(real_features, generated_features):
    if _single_block_ok(real_features):
        (sq,) = _pallas_small_sums([(real_features, generated_features, "sq")])
    else:
        (sq,) = _streaming_sums([(real_features, generated_features, "sq")])
    return sq / jnp.float32(real_features.size)


@jax.jit
def _latent_loss_l2_l1(real_features, generated_features,
                       average_dlatents, dlatents):
    n_feat = real_features.size
    n_dl = dlatents.size
    if _single_block_ok(real_features) and _single_block_ok(dlatents):
        sq, l1 = _pallas_small_sums([
            (real_features, generated_features, "sq"),
            (average_dlatents, dlatents, "abs")])
    else:
        sq, l1 = _streaming_sums([
            (real_features, generated_features, "sq"),
            (average_dlatents, dlatents, "abs")])
    return sq / jnp.float32(n_feat) + 512.0 * (l1 / jnp.float32(n_dl))


def latent_loss(real_features, generated_features,
                average_dlatents=None, dlatents=None):
    """JAX/Pallas port of LatentLoss.forward."""
    if average_dlatents is not None and dlatents is not None:
        return _latent_loss_l2_l1(real_features, generated_features,
                                  average_dlatents, dlatents)
    # NOTE: LogCoshLoss is constructed in the PyTorch module but never used in
    # forward, so it is intentionally not computed here.
    return _latent_loss_l2(real_features, generated_features)


if __name__ == "__main__":
    key = jax.random.PRNGKey(0)
    keys = jax.random.split(key, 8)

    # Small shapes consistent with the module's forward (tiny fused fast path).
    real_features = jax.random.normal(keys[0], (2, 4, 16, 16), dtype=jnp.float32)
    generated_features = jax.random.normal(keys[1], (2, 4, 16, 16), dtype=jnp.float32)
    average_dlatents = jax.random.normal(keys[2], (2, 8, 32), dtype=jnp.float32)
    dlatents = jax.random.normal(keys[3], (2, 8, 32), dtype=jnp.float32)

    out = latent_loss(real_features, generated_features,
                      average_dlatents, dlatents)
    out = jax.block_until_ready(out)
    ref = jnp.mean((real_features - generated_features) ** 2) \
        + 512.0 * jnp.mean(jnp.abs(average_dlatents - dlatents))
    assert jnp.allclose(out, ref, rtol=1e-5, atol=1e-5), (out, ref)

    # L2-only path (dlatents omitted).
    out_l2 = jax.block_until_ready(latent_loss(real_features, generated_features))
    ref_l2 = jnp.mean((real_features - generated_features) ** 2)
    assert jnp.allclose(out_l2, ref_l2, rtol=1e-5, atol=1e-5), (out_l2, ref_l2)

    # Fused streaming path: multi-step grid, masked partial tiles, gated short
    # stream, jnp tails, and (on multi-TC chips) the parallel core axis.
    big_a = jax.random.normal(keys[4], (3_000_001,), dtype=jnp.float32)
    big_b = jax.random.normal(keys[5], (3_000_001,), dtype=jnp.float32)
    big_c = jax.random.normal(keys[6], (1_500_003,), dtype=jnp.float32)
    big_d = jax.random.normal(keys[7], (1_500_003,), dtype=jnp.float32)
    out_big = jax.block_until_ready(latent_loss(big_a, big_b, big_c, big_d))
    ref_big = jnp.mean((big_a - big_b) ** 2) \
        + 512.0 * jnp.mean(jnp.abs(big_c - big_d))
    assert jnp.allclose(out_big, ref_big, rtol=1e-4, atol=1e-3), (out_big, ref_big)

    # L2-only streaming path.
    out_big_l2 = jax.block_until_ready(latent_loss(big_a, big_b))
    ref_big_l2 = jnp.mean((big_a - big_b) ** 2)
    assert jnp.allclose(out_big_l2, ref_big_l2, rtol=1e-4, atol=1e-4), \
        (out_big_l2, ref_big_l2)

    print("KERNEL_OK")
</pallas_src>

<mosaic_0001>
module attributes {stable_mosaic.version = 11 : i64} {
  func.func @kernel(%arg0: memref<16x128xf32, #tpu.memory_space<vmem>>, %arg1: memref<16x128xf32, #tpu.memory_space<vmem>>, %arg2: memref<4x128xf32, #tpu.memory_space<vmem>>, %arg3: memref<4x128xf32, #tpu.memory_space<vmem>>, %arg4: memref<1x1xf32, #tpu.memory_space<vmem>>, %arg5: memref<1x1xf32, #tpu.memory_space<vmem>>) attributes {dimension_semantics = [], scalar_prefetch = 0 : i64, scratch_operands = 0 : i64, tpu.core_type = #tpu.core_type<tc>} {
    %c0 = arith.constant 0 : index
    %c0_0 = arith.constant 0 : index
    %0 = vector.load %arg0[%c0, %c0_0] : memref<16x128xf32, #tpu.memory_space<vmem>>, vector<16x128xf32>
    %c0_1 = arith.constant 0 : index
    %c0_2 = arith.constant 0 : index
    %1 = vector.load %arg1[%c0_1, %c0_2] : memref<16x128xf32, #tpu.memory_space<vmem>>, vector<16x128xf32>
    %2 = arith.subf %0, %1 : vector<16x128xf32>
    %3 = arith.mulf %2, %2 : vector<16x128xf32>
    %4 = vector.shape_cast %3 : vector<16x128xf32> to vector<1x16x128xf32>
    %cst = arith.constant dense<0.000000e+00> : vector<1xf32>
    %5 = vector.multi_reduction <add>, %4, %cst [1, 2] : vector<1x16x128xf32> to vector<1xf32>
    %6 = vector.shape_cast %5 : vector<1xf32> to vector<1x1x1xf32>
    %7 = vector.extract %6[0, 0, 0] : f32 from vector<1x1x1xf32>
    %8 = vector.broadcast %7 : f32 to vector<1x1xf32>
    %c0_3 = arith.constant 0 : index
    %c0_4 = arith.constant 0 : index
    %9 = vector.load %arg4[%c0_3, %c0_4] : memref<1x1xf32, #tpu.memory_space<vmem>>, vector<1x1xf32>
    tpu.vector_store %arg4[%c0_3, %c0_4], %8 {strides = array<i32>} : memref<1x1xf32, #tpu.memory_space<vmem>>, vector<1x1xf32>,
    %c0_5 = arith.constant 0 : index
    %c0_6 = arith.constant 0 : index
    %10 = vector.load %arg2[%c0_5, %c0_6] : memref<4x128xf32, #tpu.memory_space<vmem>>, vector<4x128xf32>
    %c0_7 = arith.constant 0 : index
    %c0_8 = arith.constant 0 : index
    %11 = vector.load %arg3[%c0_7, %c0_8] : memref<4x128xf32, #tpu.memory_space<vmem>>, vector<4x128xf32>
    %12 = arith.subf %10, %11 : vector<4x128xf32>
    %13 = math.absf %12 : vector<4x128xf32>
    %14 = vector.shape_cast %13 : vector<4x128xf32> to vector<1x4x128xf32>
    %cst_9 = arith.constant dense<0.000000e+00> : vector<1xf32>
    %15 = vector.multi_reduction <add>, %14, %cst_9 [1, 2] : vector<1x4x128xf32> to vector<1xf32>
    %16 = vector.shape_cast %15 : vector<1xf32> to vector<1x1x1xf32>
    %17 = vector.extract %16[0, 0, 0] : f32 from vector<1x1x1xf32>
    %18 = vector.broadcast %17 : f32 to vector<1x1xf32>
    %c0_10 = arith.constant 0 : index
    %c0_11 = arith.constant 0 : index
    %19 = vector.load %arg5[%c0_10, %c0_11] : memref<1x1xf32, #tpu.memory_space<vmem>>, vector<1x1xf32>
    tpu.vector_store %arg5[%c0_10, %c0_11], %18 {strides = array<i32>} : memref<1x1xf32, #tpu.memory_space<vmem>>, vector<1x1xf32>,
    return
  }
}

</mosaic_0001>

<llo_original>
// kernel: _latent_loss_l2_l1.1
$region0: #{_latent_loss_l2_l1.1}
  #allocation0 [shape = 'u32[]', space=smem, size = 0x4, offset = 0x4, fixed_abs, tag = 'smem constant byte address 0x4 - core index']
  #allocation1 [shape = 'u32[144,128]{1,0:T(1,128)}', space=vmem, size = 0x12000, scoped, tag = 'internal scratch']
  %s0 = inlined_call_operand.vmem [shape: f32[16,128], index: 0, kind: input, shape index: {}]
  %s1 = inlined_call_operand.vmem [shape: f32[16,128], index: 1, kind: input, shape index: {}]
  %s2 = inlined_call_operand.vmem [shape: f32[4,128], index: 2, kind: input, shape index: {}]
  %s3 = inlined_call_operand.vmem [shape: f32[4,128], index: 3, kind: input, shape index: {}]
  %s4 = inlined_call_operand.hbm [shape: f32[1,1], index: 4, kind: output, shape index: {0}]
  %s5 = inlined_call_operand.hbm [shape: f32[1,1], index: 5, kind: output, shape index: {1}]
  %6 = xla_tuple %s4, %s5
  %s7 = sld [smem:[#allocation0]]
  $region34: #{_latent_loss_l2_l1.1} parent=0
    _
  %s9 = ssub.s32 1, %s7
  %s10 = scalar_select 0, %s9, %s7
  $region1: #{_latent_loss_l2_l1.1} parent=0
    #allocation2 [shape = 'u8[512]{0}', space=vmem, size = 0x400, scoped, tag = 'output window, operand 0, single buffered']
    #allocation3 [shape = 's32[1]{0}', space=sflag, size = 0x4, scoped, tag = 'scoped memory for _latent_loss_l2_l1.1']
    #allocation4 [shape = 'u8[512]{0}', space=vmem, size = 0x400, scoped, tag = 'output window, operand 1, single buffered']
    #allocation5 [shape = 's32[1]{0}', space=sflag, size = 0x4, scoped, tag = 'scoped memory for _latent_loss_l2_l1.1']
    %11 = vsyncpa [#allocation3], 0
    %12 = vsyncpa [#allocation5], 0
    // Predicated region
    $region2: #{_latent_loss_l2_l1.1} parent=1 // pred_check
      _
    $region3: #{_latent_loss_l2_l1.1} parent=1 // pred_check_branch
      %14 = sbr.rel (0) target = $region5
    $region4: #{_latent_loss_l2_l1.1} parent=1 // pred_region
      _
    $region5: #{_latent_loss_l2_l1.1} parent=1 // pred_fallthru
      _
    // Predicated region
    $region6: #{_latent_loss_l2_l1.1} parent=1 // pred_check
      _
    $region7: #{_latent_loss_l2_l1.1} parent=1 // pred_check_branch
      %16 = sbr.rel (0) target = $region9
    $region8: #{_latent_loss_l2_l1.1} parent=1 // pred_region
      _
    $region9: #{_latent_loss_l2_l1.1} parent=1 // pred_fallthru
      _
    // Predicated region
    $region10: #{_latent_loss_l2_l1.1} parent=1 // pred_check
      _
    $region11: #{_latent_loss_l2_l1.1} parent=1 // pred_check_branch
      %18 = sbr.rel (0) target = $region13
    $region12: #{_latent_loss_l2_l1.1} parent=1 // pred_region
      _
    $region13: #{_latent_loss_l2_l1.1} parent=1 // pred_fallthru
      _
    // Predicated region
    $region14: #{_latent_loss_l2_l1.1} parent=1 // pred_check
      _
    $region15: #{_latent_loss_l2_l1.1} parent=1 // pred_check_branch
      %20 = sbr.rel (0) target = $region17
    $region16: #{_latent_loss_l2_l1.1} parent=1 // pred_region
      _
    $region17: #{_latent_loss_l2_l1.1} parent=1 // pred_fallthru
      _
    %v21 = vld [vmem:[%s0] sm:$0xff]
    %v22 = vld [vmem:[%s0 + $0x8] sm:$0xff]
    %v23 = vld [vmem:[%s1] sm:$0xff]
    %v24 = vld [vmem:[%s1 + $0x8] sm:$0xff]
    %v25 = vsub.f32 %v21, %v23
    %v26 = vsub.f32 %v22, %v24
    %v27 = vmul.f32 %v25, %v25
    %v28 = vmul.f32 %v26, %v26
    %v29 = vadd.f32 %v27, %v28
    %30 = vadd.xlane.f32.xlu0 %v29
    %v31 = vpop.xlane.xlu0 %30
    %v32 = vrot.slane %v31, 4
    %v33 = vadd.f32 %v31, %v32
    %v34 = vrot.slane %v33, 2
    %v35 = vadd.f32 %v33, %v34
    %v36 = vrot.slane %v35, 1
    %v37 = vadd.f32 %v35, %v36
    %s38 = vtos %v37
    %v39 = vstv %s38
    %vm40 = vcmask 0
    %41 = vst.msk [vmem:[#allocation2] sm:$0x1] %vm40, %v39
    %v42 = vld [vmem:[%s2] sm:$0xf]
    %v43 = vld [vmem:[%s3] sm:$0xf]
    %v44 = vsub.f32 %v42, %v43
    %v45 = vand.u32 2147483647, %v44
    %vm46 = vcmask 1043456
    %v47 = vsel %vm46, %v45, 0.0
    %48 = vadd.xlane.f32.xlu0 %v47
    %v49 = vpop.xlane.xlu0 %48
    %v50 = vrot.slane %v49, 4
    %v51 = vadd.f32 %v49, %v50
    %v52 = vrot.slane %v51, 2
    %v53 = vadd.f32 %v51, %v52
    %v54 = vrot.slane %v53, 1
    %v55 = vadd.f32 %v53, %v54
    %s56 = vtos %v55
    %v57 = vstv %s56
    %58 = vst.msk [vmem:[#allocation4] sm:$0x1] %vm40, %v57
    // Predicated region
    $region18: #{_latent_loss_l2_l1.1} parent=1 // pred_check
      _
    $region19: #{_latent_loss_l2_l1.1} parent=1 // pred_check_branch
      %60 = sbr.rel (0) target = $region21
    $region20: #{_latent_loss_l2_l1.1} parent=1 // pred_region
      %s62 = ssub.s32 16, 16
      %63 = vsyncadd [#allocation3], %s62
      %s65 = sshll.u32 [#allocation2], 4
      %s66 = int_to_ptr.vmem [resolvable:$true] %s65
      %68 = dma.vmem_to_hbm [thread:$0]  %s66, 16, %s4, [#allocation3]
    $region21: #{_latent_loss_l2_l1.1} parent=1 // pred_fallthru
      _
    // Predicated region
    $region22: #{_latent_loss_l2_l1.1} parent=1 // pred_check
      _
    $region23: #{_latent_loss_l2_l1.1} parent=1 // pred_check_branch
      %70 = sbr.rel (0) target = $region25
    $region24: #{_latent_loss_l2_l1.1} parent=1 // pred_region
      %s72 = ssub.s32 16, 16
      %73 = vsyncadd [#allocation5], %s72
      %s75 = sshll.u32 [#allocation4], 4
      %s76 = int_to_ptr.vmem [resolvable:$true] %s75
      %78 = dma.vmem_to_hbm [thread:$0]  %s76, 16, %s5, [#allocation5]
    $region25: #{_latent_loss_l2_l1.1} parent=1 // pred_fallthru
      _
    // Predicated region
    $region26: #{_latent_loss_l2_l1.1} parent=1 // pred_check
      _
    $region27: #{_latent_loss_l2_l1.1} parent=1 // pred_check_branch
      %80 = sbr.rel (0) target = $region29
    $region28: #{_latent_loss_l2_l1.1} parent=1 // pred_region
      %81 = dma.done [#allocation3], 16
    $region29: #{_latent_loss_l2_l1.1} parent=1 // pred_fallthru
      _
    // Predicated region
    $region30: #{_latent_loss_l2_l1.1} parent=1 // pred_check
      _
    $region31: #{_latent_loss_l2_l1.1} parent=1 // pred_check_branch
      %83 = sbr.rel (0) target = $region33
    $region32: #{_latent_loss_l2_l1.1} parent=1 // pred_region
      %84 = dma.done [#allocation5], 16
    $region33: #{_latent_loss_l2_l1.1} parent=1 // pred_fallthru
      _
    %85 = vsyncpa [#allocation3], 1
    %86 = vsyncpa [#allocation5], 1

</llo_original>
